<compile_context>
chip_gen: v7x
topology: tpu7x:2x2x1
jax: 0.10.0
libtpu: 0.0.40
codegen_flags: <defaults>
</compile_context>

<pallas_src>
import functools
import math

import jax
import jax.numpy as jnp
from jax import lax
from jax.experimental import pallas as pl
from jax.experimental.pallas import tpu as pltpu


# ---------------------------------------------------------------------------
# Kernel 1: tiny attention  att = sigmoid(leaky_relu(x1 @ W1.T) @ W2.T)
# Single invocation (everything fits in VMEM); computed once, NOT per tile.
# ---------------------------------------------------------------------------
def _attention_kernel(x1_ref, w1_ref, w2_ref, att_ref, *, slope):
    x1 = x1_ref[...].astype(jnp.float32)                  # (B, C_in)
    w1 = w1_ref[...].astype(jnp.float32)                  # (C_mid, C_in)
    w2 = w2_ref[...].astype(jnp.float32)                  # (C_out, C_mid)
    # 1x1 Conv1d (bias=False) == matmul contracting the channel dim (no transpose).
    h = lax.dot_general(x1, w1, (((1,), (1,)), ((), ())),
                        preferred_element_type=jnp.float32)            # (B, C_mid)
    h = jnp.where(h >= 0, h, slope * h)                                 # LeakyReLU(0.1)
    a = lax.dot_general(h, w2, (((1,), (1,)), ((), ())),
                        preferred_element_type=jnp.float32)            # (B, C_out)
    att_ref[...] = jax.nn.sigmoid(a)


# ---------------------------------------------------------------------------
# Kernel 2: streamed broadcast multiply  out[r, k] = x0[r, k] * att[r, k // L]
# ---------------------------------------------------------------------------
def _scale_expand_kernel(att_ref, e_ref, x_ref, o_ref):
    # att: (bb, cpr)  e: (cpr, W) 0/1 expansion  x/o: (bb, W) in x0's native dtype
    att_exp = jnp.dot(att_ref[...], e_ref[...],
                      preferred_element_type=jnp.float32)               # (bb, W)
    o_ref[...] = x_ref[...] * att_exp.astype(o_ref.dtype)


def _scale_kernel(att_ref, x_ref, o_ref):
    # L == 1: attention already has one value per element of x0 (no expansion).
    o_ref[...] = x_ref[...] * att_ref[...].astype(o_ref.dtype)


# ---------------------------------------------------------------------------
# Wrapper
# ---------------------------------------------------------------------------
def _sublane_multiple(dtype):
    bits = jnp.dtype(dtype).itemsize * 8
    return max(8, 256 // bits)            # f32 -> 8, bf16 -> 16, int8/fp8 -> 32


def _choose_width(total, L):
    """Lane width W of the (total // W, W) view of x0.

    Requires W | total and L | W; prefers 128 | W (unmasked lane-dense stores)
    and keeps W / L <= ~64 so the expansion matmul stays negligible vs. the
    HBM stream.  Returns None if lcm(L, 128) does not divide `total`.
    """
    unit = L * 128 // math.gcd(L, 128)    # lcm(L, 128)
    if total % unit != 0:
        return None
    target = max(unit, min(2048, total // 8, 64 * L))
    best, k = unit, unit
    while k <= target:
        if total % k == 0:
            best = k
        k += unit
    return best


def ca_layer1d(x0, x1, w1, w2, *, negative_slope=0.1, donate_x0=False):
    """x0: (B, C_out, L), x1: (B, C_in), w1: (C_mid, C_in), w2: (C_out, C_mid)."""
    B, C_out, L = x0.shape
    _, C_in = x1.shape
    C_mid = w1.shape[0]
    assert x1.shape == (B, C_in)
    assert w1.shape == (C_mid, C_in)
    assert w2.shape == (C_out, C_mid)

    # ---- (1) attention, computed once (tiny: (B, C_out) values) -------------
    att = pl.pallas_call(
        functools.partial(_attention_kernel, slope=negative_slope),
        out_shape=jax.ShapeDtypeStruct((B, C_out), jnp.float32),
    )(x1, w1, w2)

    # ---- (2) lane-dense 2-D view of the big tensor --------------------------
    total = B * C_out * L
    W = _choose_width(total, L)
    if W is None:
        # Fallback when lcm(L, 128) does not divide B*C_out*L: one batch element
        # per row (block's last dim equals the full array dim -> always legal).
        # TODO(synk): pathological shapes where even 8 rows of width C_out*L
        # overflow VMEM would additionally need lane tiling.
        W = C_out * L
    N = total // W
    cpr = W // L                                   # channels covered by one row

    x0_2d = x0.reshape(N, W)                       # free: row-major contiguous
    att_2d = att.reshape(N, cpr)                   # free: same row-major order

    # ---- (3) row tiling ------------------------------------------------------
    itemsize = jnp.dtype(x0.dtype).itemsize
    sub = _sublane_multiple(x0.dtype)
    # ~4 MiB of x0 per grid step: amortizes the ~0.35 us/step pipeline overhead
    # while 2x(in+out) double buffers stay far under v7x's 64 MiB VMEM.
    rows_target = max(sub, ((4 * 1024 * 1024) // (W * itemsize)) // sub * sub)
    if N <= sub:
        block_rows = N
    else:
        block_rows = max(sub, min(rows_target, (N // sub) * sub))
        # keep >= 2 grid steps when there is enough work (v7x megacore sharding)
        if block_rows >= N and N >= 2 * sub:
            block_rows = max(sub, ((N // 2) // sub) * sub)
    # conservative VMEM guard for the two double-buffered (block_rows, W) streams
    budget = 36 * 1024 * 1024
    while block_rows > sub and 4 * block_rows * W * itemsize > budget:
        block_rows = max(sub, ((block_rows // 2) // sub) * sub)
    nr = pl.cdiv(N, block_rows)

    est_vmem = (4 * block_rows * W * itemsize        # x0 in + out, double buffered
                + 2 * block_rows * cpr * 4           # att tiles
                + 2 * cpr * W * 4                    # expansion matrix
                + (2 << 20))                         # headroom
    vmem_limit = int(min(56 * 1024 * 1024, max(32 * 1024 * 1024, est_vmem)))

    compiler_params = pltpu.CompilerParams(
        dimension_semantics=("parallel",),
        vmem_limit_bytes=vmem_limit,
    )

    if L == 1:
        in_specs = [
            pl.BlockSpec((block_rows, W), lambda i: (i, 0)),    # att (1:1 with x0)
            pl.BlockSpec((block_rows, W), lambda i: (i, 0)),    # x0 stream
        ]
        operands = (att_2d, x0_2d)
        kernel = _scale_kernel
        aliases = {1: 0} if donate_x0 else {}
    else:
        # Fixed small 0/1 expansion matrix (channel -> lane), decoupled from the
        # tile size: E[c, k] = (k // L == c), shape (cpr, W).
        e = (jnp.arange(W, dtype=jnp.int32)[None, :] // L
             == jnp.arange(cpr, dtype=jnp.int32)[:, None]).astype(jnp.float32)
        in_specs = [
            pl.BlockSpec((block_rows, cpr), lambda i: (i, 0)),  # att rows
            pl.BlockSpec((cpr, W), lambda i: (0, 0)),           # e (resident)
            pl.BlockSpec((block_rows, W), lambda i: (i, 0)),    # x0 stream
        ]
        operands = (att_2d, e, x0_2d)
        kernel = _scale_expand_kernel
        aliases = {2: 0} if donate_x0 else {}

    out_2d = pl.pallas_call(
        kernel,
        out_shape=jax.ShapeDtypeStruct((N, W), x0.dtype),
        grid_spec=pltpu.PrefetchScalarGridSpec(
            num_scalar_prefetch=0,
            grid=(nr,),
            in_specs=in_specs,
            out_specs=pl.BlockSpec((block_rows, W), lambda i: (i, 0)),
        ),
        compiler_params=compiler_params,
        input_output_aliases=aliases,
    )(*operands)

    return out_2d.reshape(B, C_out, L)


# ---------------------------------------------------------------------------
# Reference + test
# ---------------------------------------------------------------------------
def _reference(x0, x1, w1, w2, slope=0.1):
    h = x1 @ w1.T
    h = jnp.where(h >= 0, h, slope * h)
    att = jax.nn.sigmoid(h @ w2.T)
    return x0 * att[:, :, None]


if __name__ == "__main__":
    # Module config: channels_in = channels_out = 32, reduction = 4 -> C_mid = 8
    B, C_in, C_out, L = 2, 32, 32, 16
    reduction = 4
    C_mid = C_in // reduction

    key = jax.random.PRNGKey(0)
    k0, k1, k2, k3 = jax.random.split(key, 4)

    x0 = jax.random.normal(k0, (B, C_out, L), dtype=jnp.float32)   # feature map
    x1 = jax.random.normal(k1, (B, C_in), dtype=jnp.float32)       # descriptor
    # kernel_size=1, bias=False Conv1d weights, squeezed over the kernel dim
    w1 = jax.random.normal(k2, (C_mid, C_in), dtype=jnp.float32) * 0.1
    w2 = jax.random.normal(k3, (C_out, C_mid), dtype=jnp.float32) * 0.1

    out = ca_layer1d(x0, x1, w1, w2)
    jax.block_until_ready(out)

    ref = _reference(x0, x1, w1, w2)
    assert out.shape == (B, C_out, L)
    assert jnp.allclose(out, ref, atol=1e-5, rtol=1e-5), "mismatch vs reference"

    print("KERNEL_OK")
</pallas_src>

<mosaic_0001>
module attributes {stable_mosaic.version = 11 : i64} {
  func.func @_attention_kernel(%arg0: memref<2x32xf32, #tpu.memory_space<vmem>>, %arg1: memref<8x32xf32, #tpu.memory_space<vmem>>, %arg2: memref<32x8xf32, #tpu.memory_space<vmem>>, %arg3: memref<2x32xf32, #tpu.memory_space<vmem>>) attributes {dimension_semantics = [], scalar_prefetch = 0 : i64, scratch_operands = 0 : i64, tpu.core_type = #tpu.core_type<tc>} {
    %c0 = arith.constant 0 : index
    %c0_0 = arith.constant 0 : index
    %0 = vector.load %arg0[%c0, %c0_0] : memref<2x32xf32, #tpu.memory_space<vmem>>, vector<2x32xf32>
    %c0_1 = arith.constant 0 : index
    %c0_2 = arith.constant 0 : index
    %1 = vector.load %arg1[%c0_1, %c0_2] : memref<8x32xf32, #tpu.memory_space<vmem>>, vector<8x32xf32>
    %c0_3 = arith.constant 0 : index
    %c0_4 = arith.constant 0 : index
    %2 = vector.load %arg2[%c0_3, %c0_4] : memref<32x8xf32, #tpu.memory_space<vmem>>, vector<32x8xf32>
    %cst = arith.constant dense<0.000000e+00> : vector<2x8xf32>
    %3 = tpu.matmul %0, %1, %cst {dimension_numbers = #tpu.dot_dimension_numbers<[1], [1], [0], [0], [0, 0, 1, 0], [], []>} : vector<2x32xf32>, vector<8x32xf32>, vector<2x8xf32> -> vector<2x8xf32>
    %cst_5 = arith.constant 0.000000e+00 : f32
    %4 = vector.broadcast %cst_5 : f32 to vector<2x8xf32>
    %5 = arith.cmpf oge, %3, %4 : vector<2x8xf32>
    %cst_6 = arith.constant 1.000000e-01 : f32
    %6 = vector.broadcast %cst_6 : f32 to vector<2x8xf32>
    %7 = arith.mulf %6, %3 : vector<2x8xf32>
    %8 = arith.select %5, %3, %7 : vector<2x8xi1>, vector<2x8xf32>
    %cst_7 = arith.constant dense<0.000000e+00> : vector<2x32xf32>
    %9 = tpu.matmul %8, %2, %cst_7 {dimension_numbers = #tpu.dot_dimension_numbers<[1], [1], [0], [0], [0, 0, 1, 0], [], []>} : vector<2x8xf32>, vector<32x8xf32>, vector<2x32xf32> -> vector<2x32xf32>
    %10 = arith.negf %9 : vector<2x32xf32>
    %11 = math.exp %10 : vector<2x32xf32>
    %cst_8 = arith.constant 1.000000e+00 : f32
    %12 = vector.broadcast %cst_8 : f32 to vector<2x32xf32>
    %13 = arith.addf %12, %11 : vector<2x32xf32>
    %14 = arith.divf %12, %13 : vector<2x32xf32>
    %c0_9 = arith.constant 0 : index
    %c0_10 = arith.constant 0 : index
    %15 = vector.load %arg3[%c0_9, %c0_10] : memref<2x32xf32, #tpu.memory_space<vmem>>, vector<2x32xf32>
    tpu.vector_store %arg3[%c0_9, %c0_10], %14 {strides = array<i32>} : memref<2x32xf32, #tpu.memory_space<vmem>>, vector<2x32xf32>,
    return
  }
}

</mosaic_0001>

<llo_original>
// kernel: tpu_custom_call.1
$region0: #{tpu_custom_call.1}
  #allocation0 [shape = 'u32[]', space=smem, size = 0x4, offset = 0x4, fixed_abs, tag = 'smem constant byte address 0x4 - core index']
  #allocation1 [shape = 'u32[144,128]{1,0:T(1,128)}', space=vmem, size = 0x12000, scoped, tag = 'internal scratch']
  %s0 = inlined_call_operand.vmem [shape: f32[2,32], index: 0, kind: input, shape index: {}]
  %s1 = inlined_call_operand.vmem [shape: f32[8,32], index: 1, kind: input, shape index: {}]
  %s2 = inlined_call_operand.vmem [shape: f32[32,8], index: 2, kind: input, shape index: {}]
  %s3 = inlined_call_operand.hbm [shape: f32[2,32], index: 3, kind: output, shape index: {}]
  %s4 = sld [smem:[#allocation0]]
  $region22: #{tpu_custom_call.1} parent=0
    _
  %s6 = ssub.s32 1, %s4
  %s7 = scalar_select 0, %s6, %s4
  $region1: #{tpu_custom_call.1} parent=0
    #allocation2 [shape = 'u8[1024]{0}', space=vmem, size = 0x400, scoped, tag = 'output window, operand 0, single buffered']
    #allocation3 [shape = 's32[1]{0}', space=sflag, size = 0x4, scoped, tag = 'scoped memory for tpu_custom_call.1']
    %8 = vsyncpa [#allocation3], 0
    // Predicated region
    $region2: #{tpu_custom_call.1} parent=1 // pred_check
      _
    $region3: #{tpu_custom_call.1} parent=1 // pred_check_branch
      %10 = sbr.rel (0) target = $region5
    $region4: #{tpu_custom_call.1} parent=1 // pred_region
      _
    $region5: #{tpu_custom_call.1} parent=1 // pred_fallthru
      _
    // Predicated region
    $region6: #{tpu_custom_call.1} parent=1 // pred_check
      _
    $region7: #{tpu_custom_call.1} parent=1 // pred_check_branch
      %12 = sbr.rel (0) target = $region9
    $region8: #{tpu_custom_call.1} parent=1 // pred_region
      _
    $region9: #{tpu_custom_call.1} parent=1 // pred_fallthru
      _
    // Predicated region
    $region10: #{tpu_custom_call.1} parent=1 // pred_check
      _
    $region11: #{tpu_custom_call.1} parent=1 // pred_check_branch
      %14 = sbr.rel (0) target = $region13
    $region12: #{tpu_custom_call.1} parent=1 // pred_region
      _
    $region13: #{tpu_custom_call.1} parent=1 // pred_fallthru
      _
    %v15 = vld [vmem:[%s0] sm:$0x3]
    %v16 = vld [vmem:[%s1] sm:$0xff]
    %v17 = vld [vmem:[%s2] sm:$0xff]
    %v18 = vld [vmem:[%s2 + $0x8] sm:$0xff]
    %v19 = vld [vmem:[%s2 + $0x10] sm:$0xff]
    %v20 = vld [vmem:[%s2 + $0x18] sm:$0xff]
    %vm21 = vcmask 261120
    %v23 = vsel %vm21, %v15, 0
    %v26 = vsel %vm21, %v16, 0
    %28 = vmatprep.subr.mxu0 0.0
    %29 = vmatpush1.xpose.msra.mxu0 %v26
    %30 = vmatprep.subr.mxu0 0.0
    %31 = vmatpush1.xpose.msra.mxu0 0.0
    %32 = vmatprep.subr.mxu0 0.0
    %33 = vmatpush1.xpose.msra.mxu0 0.0
    %34 = vmatprep.subr.mxu0 0.0
    %35 = vmatpush1.xpose.msra.mxu0 0.0
    %36 = vmatprep.subr.mxu0 0.0
    %37 = vmatpush1.xpose.msra.mxu0 0.0
    %38 = vmatprep.subr.mxu0 0.0
    %39 = vmatpush1.xpose.msra.mxu0 0.0
    %40 = vmatprep.subr.mxu0 0.0
    %41 = vmatpush1.xpose.msra.mxu0 0.0
    %42 = vmatprep.subr.mxu0 0.0
    %43 = vmatpush1.xpose.msra.mxu0 0.0
    %44 = vmatprep.subr.mxu0 0.0
    %45 = vmatpush1.xpose.msra.mxu0 0.0
    %46 = vmatprep.subr.mxu0 0.0
    %47 = vmatpush1.xpose.msra.mxu0 0.0
    %48 = vmatprep.subr.mxu0 0.0
    %49 = vmatpush1.xpose.msra.mxu0 0.0
    %50 = vmatprep.subr.mxu0 0.0
    %51 = vmatpush1.xpose.msra.mxu0 0.0
    %52 = vmatprep.subr.mxu0 0.0
    %53 = vmatpush1.xpose.msra.mxu0 0.0
    %54 = vmatprep.subr.mxu0 0.0
    %55 = vmatpush1.xpose.msra.mxu0 0.0
    %56 = vmatprep.subr.mxu0 0.0
    %57 = vmatpush1.xpose.msra.mxu0 0.0
    %58 = vmatprep.subr.mxu0 0.0
    %59 = vmatpush1.xpose.msra.mxu0 0.0
    %60 = vmatprep.subr.mxu0 0.0
    %61 = vmatpush1.xpose.msra.mxu0 0.0
    %62 = vmatprep.subr.mxu0 0.0
    %63 = vmatpush1.xpose.msra.mxu0 0.0
    %64 = vmatprep.subr.mxu0 0.0
    %65 = vmatpush1.xpose.msra.mxu0 0.0
    %66 = vmatprep.subr.mxu0 0.0
    %67 = vmatpush1.xpose.msra.mxu0 0.0
    %68 = vmatprep.subr.mxu0 0.0
    %69 = vmatpush1.xpose.msra.mxu0 0.0
    %70 = vmatprep.subr.mxu0 0.0
    %71 = vmatpush1.xpose.msra.mxu0 0.0
    %72 = vmatprep.subr.mxu0 0.0
    %73 = vmatpush1.xpose.msra.mxu0 0.0
    %74 = vmatprep.subr.mxu0 0.0
    %75 = vmatpush1.xpose.msra.mxu0 0.0
    %76 = vmatprep.subr.mxu0 0.0
    %77 = vmatpush1.xpose.msra.mxu0 0.0
    %78 = vmatprep.subr.mxu0 0.0
    %79 = vmatpush1.xpose.msra.mxu0 0.0
    %80 = vmatprep.subr.mxu0 0.0
    %81 = vmatpush1.xpose.msra.mxu0 0.0
    %82 = vmatprep.subr.mxu0 0.0
    %83 = vmatpush1.xpose.msra.mxu0 0.0
    %84 = vmatprep.subr.mxu0 0.0
    %85 = vmatpush1.xpose.msra.mxu0 0.0
    %86 = vmatprep.subr.mxu0 0.0
    %87 = vmatpush1.xpose.msra.mxu0 0.0
    %88 = vmatprep.subr.mxu0 0.0
    %89 = vmatpush1.xpose.msra.mxu0 0.0
    %90 = vmatprep.subr.mxu0 0.0
    %91 = vmatpush1.xpose.msra.mxu0 0.0
    %92 = vmatprep.mubr.f32.mxu0 0.0
    %93 = vmatmul.mubr.f32.gmra.mrb[0].mxu0 %v23
    %v94 = vpop.f32.mrb[0].mxu0
    %v95 = vadd.f32 0.0, %v94
    %v96 = vpop.f32.mrb[0].mxu0
    %97 = vdwg.mxu0
    %vm98 = vcmp.ge.f32.partialorder %v95, 0.0
    %v99 = vmul.f32 %v95, 0.1
    %v100 = vsel %vm98, %v95, %v99
    %vm101 = vcmask 64512
    %v103 = vsel %vm101, %v100, 0
    %v106 = vsel %vm101, %v17, 0
    %v109 = vsel %vm101, %v18, 0
    %v112 = vsel %vm101, %v19, 0
    %v115 = vsel %vm101, %v20, 0
    %117 = vmatprep.subr.mxu0 0.0
    %118 = vmatpush1.xpose.msra.mxu0 %v106
    %119 = vmatprep.subr.mxu0 0.0
    %120 = vmatpush1.xpose.msra.mxu0 %v109
    %121 = vmatprep.subr.mxu0 0.0
    %122 = vmatpush1.xpose.msra.mxu0 %v112
    %123 = vmatprep.subr.mxu0 0.0
    %124 = vmatpush1.xpose.msra.mxu0 %v115
    %125 = vmatprep.subr.mxu0 0.0
    %126 = vmatpush1.xpose.msra.mxu0 0.0
    %127 = vmatprep.subr.mxu0 0.0
    %128 = vmatpush1.xpose.msra.mxu0 0.0
    %129 = vmatprep.subr.mxu0 0.0
    %130 = vmatpush1.xpose.msra.mxu0 0.0
    %131 = vmatprep.subr.mxu0 0.0
    %132 = vmatpush1.xpose.msra.mxu0 0.0
    %133 = vmatprep.subr.mxu0 0.0
    %134 = vmatpush1.xpose.msra.mxu0 0.0
    %135 = vmatprep.subr.mxu0 0.0
    %136 = vmatpush1.xpose.msra.mxu0 0.0
    %137 = vmatprep.subr.mxu0 0.0
    %138 = vmatpush1.xpose.msra.mxu0 0.0
    %139 = vmatprep.subr.mxu0 0.0
    %140 = vmatpush1.xpose.msra.mxu0 0.0
    %141 = vmatprep.subr.mxu0 0.0
    %142 = vmatpush1.xpose.msra.mxu0 0.0
    %143 = vmatprep.subr.mxu0 0.0
    %144 = vmatpush1.xpose.msra.mxu0 0.0
    %145 = vmatprep.subr.mxu0 0.0
    %146 = vmatpush1.xpose.msra.mxu0 0.0
    %147 = vmatprep.subr.mxu0 0.0
    %148 = vmatpush1.xpose.msra.mxu0 0.0
    %149 = vmatprep.subr.mxu0 0.0
    %150 = vmatpush1.xpose.msra.mxu0 0.0
    %151 = vmatprep.subr.mxu0 0.0
    %152 = vmatpush1.xpose.msra.mxu0 0.0
    %153 = vmatprep.subr.mxu0 0.0
    %154 = vmatpush1.xpose.msra.mxu0 0.0
    %155 = vmatprep.subr.mxu0 0.0
    %156 = vmatpush1.xpose.msra.mxu0 0.0
    %157 = vmatprep.subr.mxu0 0.0
    %158 = vmatpush1.xpose.msra.mxu0 0.0
    %159 = vmatprep.subr.mxu0 0.0
    %160 = vmatpush1.xpose.msra.mxu0 0.0
    %161 = vmatprep.subr.mxu0 0.0
    %162 = vmatpush1.xpose.msra.mxu0 0.0
    %163 = vmatprep.subr.mxu0 0.0
    %164 = vmatpush1.xpose.msra.mxu0 0.0
    %165 = vmatprep.subr.mxu0 0.0
    %166 = vmatpush1.xpose.msra.mxu0 0.0
    %167 = vmatprep.subr.mxu0 0.0
    %168 = vmatpush1.xpose.msra.mxu0 0.0
    %169 = vmatprep.subr.mxu0 0.0
    %170 = vmatpush1.xpose.msra.mxu0 0.0
    %171 = vmatprep.subr.mxu0 0.0
    %172 = vmatpush1.xpose.msra.mxu0 0.0
    %173 = vmatprep.subr.mxu0 0.0
    %174 = vmatpush1.xpose.msra.mxu0 0.0
    %175 = vmatprep.subr.mxu0 0.0
    %176 = vmatpush1.xpose.msra.mxu0 0.0
    %177 = vmatprep.subr.mxu0 0.0
    %178 = vmatpush1.xpose.msra.mxu0 0.0
    %179 = vmatprep.subr.mxu0 0.0
    %180 = vmatpush1.xpose.msra.mxu0 0.0
    %181 = vmatprep.mubr.f32.mxu0 0.0
    %182 = vmatmul.mubr.f32.gmra.mrb[0].mxu0 %v103
    %v183 = vpop.f32.mrb[0].mxu0
    %v184 = vadd.f32 0.0, %v183
    %v185 = vpop.f32.mrb[0].mxu0
    %186 = vdwg.mxu0
    %v187 = vxor.u32 %v184, 2147483648
    %v188 = vmul.f32 %v187, 1.442695
    %v189 = vpow.pop %v188
    %v190 = vadd.f32 %v189, 1.0
    %v191 = vrcp.pop %v190
    %v192 = vmul.f32 1.0, %v191
    %vm193 = vcmask 254976
    %194 = vst.msk [vmem:[#allocation2] sm:$0x3] %vm193, %v192
    // Predicated region
    $region14: #{tpu_custom_call.1} parent=1 // pred_check
      _
    $region15: #{tpu_custom_call.1} parent=1 // pred_check_branch
      %196 = sbr.rel (0) target = $region17
    $region16: #{tpu_custom_call.1} parent=1 // pred_region
      %s198 = ssub.s32 32, 32
      %199 = vsyncadd [#allocation3], %s198
      %s201 = sshll.u32 [#allocation2], 4
      %s202 = int_to_ptr.vmem [resolvable:$true] %s201
      %204 = dma.vmem_to_hbm [thread:$0]  %s202, 32, %s3, [#allocation3]
    $region17: #{tpu_custom_call.1} parent=1 // pred_fallthru
      _
    // Predicated region
    $region18: #{tpu_custom_call.1} parent=1 // pred_check
      _
    $region19: #{tpu_custom_call.1} parent=1 // pred_check_branch
      %206 = sbr.rel (0) target = $region21
    $region20: #{tpu_custom_call.1} parent=1 // pred_region
      %207 = dma.done [#allocation3], 32
    $region21: #{tpu_custom_call.1} parent=1 // pred_fallthru
      _
    %208 = vsyncpa [#allocation3], 1

</llo_original>
